<compile_context>
chip_gen: v7x
topology: tpu7x:2x2x1
jax: 0.10.0
libtpu: 0.0.40
codegen_flags: <defaults>
</compile_context>

<pallas_src>
import functools

import jax
import jax.numpy as jnp
from jax.experimental import pallas as pl
from jax.experimental.pallas import tpu as pltpu

LN_EPS = 1e-12
MATMUL_VMEM_LIMIT = 48 * 1024 * 1024   # <= ~48 MiB keeps v7x (64 MiB VMEM) safe
OTHER_VMEM_LIMIT = 32 * 1024 * 1024    # explicit limit (v5e default scoped is 16 MiB)
HEAD_PAD = 128                          # pad 3-class logits to a lane-dense width


def _tile(dim, cap):
    """Largest divisor of `dim` that is <= cap (full dim if already small)."""
    if dim <= cap:
        return dim
    for t in range(cap, 0, -1):
        if dim % t == 0:
            return t
    return dim  # unreachable (t=1 always divides)


# ----------------------------- Pallas kernels ------------------------------ #

def _dense_kernel(act, x_ref, w_ref, b_ref, o_ref, acc_ref):
    # Tiled matmul with f32 accumulator; bias/activation applied on the last K step.
    @pl.when(pl.program_id(2) == 0)
    def _():
        acc_ref[...] = jnp.zeros_like(acc_ref)

    acc_ref[...] += jnp.dot(x_ref[...], w_ref[...],
                            preferred_element_type=jnp.float32)

    @pl.when(pl.program_id(2) == pl.num_programs(2) - 1)
    def _():
        y = acc_ref[...] + b_ref[...]
        if act == "tanh":
            y = jnp.tanh(y)
        elif act == "gelu":
            # TODO(synk): HF BERT default is exact erf-GELU; tanh approximation used here.
            y = jax.nn.gelu(y, approximate=True)
        o_ref[...] = y.astype(o_ref.dtype)


def pallas_dense(x, w, b, act=None, out_dtype=jnp.bfloat16,
                 tm_cap=512, tn_cap=512, tk_cap=512):
    m, k = x.shape
    k2, n = w.shape
    assert k == k2
    tm, tn, tk = _tile(m, tm_cap), _tile(n, tn_cap), _tile(k, tk_cap)
    return pl.pallas_call(
        functools.partial(_dense_kernel, act),
        out_shape=jax.ShapeDtypeStruct((m, n), out_dtype),
        grid=(m // tm, n // tn, k // tk),
        in_specs=[
            pl.BlockSpec((tm, tk), lambda i, j, kk: (i, kk)),
            pl.BlockSpec((tk, tn), lambda i, j, kk: (kk, j)),
            pl.BlockSpec((1, tn), lambda i, j, kk: (0, j)),
        ],
        out_specs=pl.BlockSpec((tm, tn), lambda i, j, kk: (i, j)),
        scratch_shapes=[pltpu.VMEM((tm, tn), jnp.float32)],
        compiler_params=pltpu.CompilerParams(
            dimension_semantics=("parallel", "parallel", "arbitrary"),
            vmem_limit_bytes=MATMUL_VMEM_LIMIT),
    )(x, w, b.reshape(1, n))


def _ln_f32(y, g, b, out_dtype):
    mu = jnp.mean(y, axis=-1, keepdims=True)
    var = jnp.mean(jnp.square(y - mu), axis=-1, keepdims=True)
    yn = (y - mu) * jax.lax.rsqrt(var + LN_EPS)
    return (yn * g + b).astype(out_dtype)


def _dense_add_ln_kernel(x_ref, w_ref, b_ref, r_ref, g_ref, be_ref, o_ref, acc_ref):
    # Matmul (tn = full N) with bias + residual + LayerNorm fused into the epilogue.
    @pl.when(pl.program_id(1) == 0)
    def _():
        acc_ref[...] = jnp.zeros_like(acc_ref)

    acc_ref[...] += jnp.dot(x_ref[...], w_ref[...],
                            preferred_element_type=jnp.float32)

    @pl.when(pl.program_id(1) == pl.num_programs(1) - 1)
    def _():
        y = acc_ref[...] + b_ref[...] + r_ref[...].astype(jnp.float32)
        o_ref[...] = _ln_f32(y, g_ref[...], be_ref[...], o_ref.dtype)


def pallas_dense_add_ln(x, w, b, res, g, beta, out_dtype=jnp.bfloat16,
                        tm_cap=512, tk_cap=512):
    m, k = x.shape
    k2, n = w.shape
    assert k == k2 and res.shape == (m, n)
    tm, tk = _tile(m, tm_cap), _tile(k, tk_cap)
    return pl.pallas_call(
        _dense_add_ln_kernel,
        out_shape=jax.ShapeDtypeStruct((m, n), out_dtype),
        grid=(m // tm, k // tk),
        in_specs=[
            pl.BlockSpec((tm, tk), lambda i, kk: (i, kk)),
            pl.BlockSpec((tk, n), lambda i, kk: (kk, 0)),
            pl.BlockSpec((1, n), lambda i, kk: (0, 0)),
            pl.BlockSpec((tm, n), lambda i, kk: (i, 0)),
            pl.BlockSpec((1, n), lambda i, kk: (0, 0)),
            pl.BlockSpec((1, n), lambda i, kk: (0, 0)),
        ],
        out_specs=pl.BlockSpec((tm, n), lambda i, kk: (i, 0)),
        scratch_shapes=[pltpu.VMEM((tm, n), jnp.float32)],
        compiler_params=pltpu.CompilerParams(
            dimension_semantics=("parallel", "arbitrary"),
            vmem_limit_bytes=MATMUL_VMEM_LIMIT),
    )(x, w, b.reshape(1, n), res, g.reshape(1, n), beta.reshape(1, n))


def _ln_kernel(x_ref, g_ref, b_ref, o_ref):
    o_ref[...] = _ln_f32(x_ref[...].astype(jnp.float32), g_ref[...], b_ref[...],
                         o_ref.dtype)


def pallas_layernorm(x, g, b, out_dtype=jnp.bfloat16, tm_cap=1024):
    m, d = x.shape
    tm = _tile(m, tm_cap)
    row_spec = pl.BlockSpec((tm, d), lambda i: (i, 0))
    vec_spec = pl.BlockSpec((1, d), lambda i: (0, 0))
    return pl.pallas_call(
        _ln_kernel,
        out_shape=jax.ShapeDtypeStruct((m, d), out_dtype),
        grid=(m // tm,),
        in_specs=[row_spec, vec_spec, vec_spec],
        out_specs=row_spec,
        compiler_params=pltpu.CompilerParams(
            dimension_semantics=("parallel",),
            vmem_limit_bytes=OTHER_VMEM_LIMIT),
    )(x, g.reshape(1, d), b.reshape(1, d))


def _attn_oproj_ln_kernel(num_heads, hidden, head_dim,
                          q_ref, kv_ref, m_ref, r_ref,
                          ow_ref, ob_ref, g_ref, be_ref,
                          o_ref, acc_ref):
    # q_ref:  (1, tq, 3H) bf16 fused Q|K|V (query rows of this block)
    # kv_ref: (1, S,  3H) bf16 fused Q|K|V (full sequence, K/V columns used)
    # Fuses: scaled-dot-product attention (scale folded into Q), output projection
    #        (accumulated per head into f32 VMEM scratch), o_b, residual, LayerNorm.
    tq = q_ref.shape[1]
    s_len = kv_ref.shape[1]

    # Mask bias broadcast hoisted out of the head loop (JAX does not CSE broadcasts).
    bias = (1.0 - m_ref[0].astype(jnp.float32)) * jnp.float32(-10000.0)     # (1, S)
    bias2d = jnp.broadcast_to(bias, (tq, s_len))                            # (tq, S)

    # TODO(synk): head slices are Dh-lane offsets (not 128-aligned); head-pair
    # slab processing would remove the lane shuffles for Dh=64 models.
    for h in range(num_heads):
        lo = h * head_dim
        q = q_ref[0, :, lo:lo + head_dim]                                   # (tq, Dh)
        k = kv_ref[0, :, hidden + lo:hidden + lo + head_dim]                # (S, Dh)
        v = kv_ref[0, :, 2 * hidden + lo:2 * hidden + lo + head_dim]        # (S, Dh)

        s = jax.lax.dot_general(q, k, (((1,), (1,)), ((), ())),
                                preferred_element_type=jnp.float32) + bias2d
        s = s - jnp.max(s, axis=-1, keepdims=True)
        p = jnp.exp(s)
        p = p * pl.reciprocal(jnp.sum(p, axis=-1, keepdims=True), approx=True)
        ctx = jnp.dot(p.astype(v.dtype), v,
                      preferred_element_type=jnp.float32)                   # (tq, Dh)

        # Fused output projection: ctx_h @ o_w[h*Dh:(h+1)*Dh, :] accumulated in VMEM.
        contrib = jnp.dot(ctx.astype(ow_ref.dtype),
                          ow_ref[lo:lo + head_dim, :],
                          preferred_element_type=jnp.float32)               # (tq, H)
        if h == 0:
            acc_ref[...] = contrib
        else:
            acc_ref[...] += contrib

    y = acc_ref[...] + ob_ref[...] + r_ref[0].astype(jnp.float32)
    o_ref[0] = _ln_f32(y, g_ref[...], be_ref[...], o_ref.dtype)


def pallas_attention_block(qkv, mask3, resid, o_w, o_b, ln_g, ln_b, num_heads,
                           tq_cap=256):
    b, s, three_h = qkv.shape
    h = three_h // 3
    dh = h // num_heads
    tq = _tile(s, tq_cap)
    kernel = functools.partial(_attn_oproj_ln_kernel, num_heads, h, dh)
    return pl.pallas_call(
        kernel,
        out_shape=jax.ShapeDtypeStruct((b, s, h), jnp.bfloat16),
        grid=(b, s // tq),
        in_specs=[
            pl.BlockSpec((1, tq, three_h), lambda i, j: (i, j, 0)),   # Q rows
            pl.BlockSpec((1, s, three_h), lambda i, j: (i, 0, 0)),    # K/V (full S)
            pl.BlockSpec((1, 1, s), lambda i, j: (i, 0, 0)),          # mask
            pl.BlockSpec((1, tq, h), lambda i, j: (i, j, 0)),         # residual
            pl.BlockSpec((h, h), lambda i, j: (0, 0)),                # o_w (resident)
            pl.BlockSpec((1, h), lambda i, j: (0, 0)),                # o_b
            pl.BlockSpec((1, h), lambda i, j: (0, 0)),                # ln gamma
            pl.BlockSpec((1, h), lambda i, j: (0, 0)),                # ln beta
        ],
        out_specs=pl.BlockSpec((1, tq, h), lambda i, j: (i, j, 0)),
        scratch_shapes=[pltpu.VMEM((tq, h), jnp.float32)],
        compiler_params=pltpu.CompilerParams(
            dimension_semantics=("parallel", "parallel"),
            vmem_limit_bytes=OTHER_VMEM_LIMIT),
    )(qkv, qkv, mask3, resid,
      o_w, o_b.reshape(1, h), ln_g.reshape(1, h), ln_b.reshape(1, h))


def _head_kernel(x_ref, w1_ref, b1_ref, w2_ref, b2_ref, o_ref):
    # fc1 -> dropout(p=0.25, identity in eval) -> out, fused.  Tiny M (=batch).
    h = jnp.dot(x_ref[...], w1_ref[...], preferred_element_type=jnp.float32) + b1_ref[...]
    # TODO(synk): training-mode stochastic dropout not implemented (eval semantics).
    o_ref[...] = (jnp.dot(h.astype(w2_ref.dtype), w2_ref[...],
                          preferred_element_type=jnp.float32)
                  + b2_ref[...]).astype(o_ref.dtype)


def pallas_head(x, w1, b1, w2, b2):
    m, k = x.shape
    n1, n2 = w1.shape[1], w2.shape[1]
    return pl.pallas_call(
        _head_kernel,
        out_shape=jax.ShapeDtypeStruct((m, n2), jnp.float32),
        grid=(1,),
        in_specs=[
            pl.BlockSpec((m, k), lambda i: (0, 0)),
            pl.BlockSpec((k, n1), lambda i: (0, 0)),
            pl.BlockSpec((1, n1), lambda i: (0, 0)),
            pl.BlockSpec((n1, n2), lambda i: (0, 0)),
            pl.BlockSpec((1, n2), lambda i: (0, 0)),
        ],
        out_specs=pl.BlockSpec((m, n2), lambda i: (0, 0)),
        compiler_params=pltpu.CompilerParams(
            vmem_limit_bytes=OTHER_VMEM_LIMIT),
    )(x, w1, b1.reshape(1, n1), w2, b2.reshape(1, n2))


# ------------------------------- Model glue -------------------------------- #

def init_params(key, cfg):
    H, I, L = cfg["hidden"], cfg["intermediate"], cfg["layers"]
    keys = iter(jax.random.split(key, 64))

    def w(shape):
        return (0.02 * jax.random.normal(next(keys), shape)).astype(jnp.float32)

    zeros = lambda s: jnp.zeros(s, jnp.float32)
    ones = lambda s: jnp.ones(s, jnp.float32)

    params = {
        "word_emb": w((cfg["vocab"], H)),
        "pos_emb": w((cfg["max_pos"], H)),
        "type_emb": w((cfg["type_vocab"], H)),
        "emb_ln_g": ones((H,)), "emb_ln_b": zeros((H,)),
        "pooler_w": w((H, H)), "pooler_b": zeros((H,)),
        "fc1_w": w((H, 512)), "fc1_b": zeros((512,)),
        "out_w": w((512, 3)), "out_b": zeros((3,)),
        "layers": [],
    }
    for _ in range(L):
        params["layers"].append({
            "q_w": w((H, H)), "q_b": zeros((H,)),
            "k_w": w((H, H)), "k_b": zeros((H,)),
            "v_w": w((H, H)), "v_b": zeros((H,)),
            "o_w": w((H, H)), "o_b": zeros((H,)),
            "attn_ln_g": ones((H,)), "attn_ln_b": zeros((H,)),
            "ffn_w1": w((H, I)), "ffn_b1": zeros((I,)),
            "ffn_w2": w((I, H)), "ffn_b2": zeros((H,)),
            "ffn_ln_g": ones((H,)), "ffn_ln_b": zeros((H,)),
        })
    return params


def prepare_params(params, num_heads):
    """bf16-cast matmul weights once, fuse Q/K/V (scale folded into Q), pad head."""
    bf16 = lambda a: a.astype(jnp.bfloat16)
    H = params["pooler_w"].shape[0]
    dh = H // num_heads
    q_scale = 1.0 / float(dh) ** 0.5

    # Pad the 3-class output projection to a lane-dense width (sliced back later).
    out_w_p = jnp.zeros((params["out_w"].shape[0], HEAD_PAD), jnp.float32)
    out_w_p = out_w_p.at[:, :3].set(params["out_w"])
    out_b_p = jnp.zeros((HEAD_PAD,), jnp.float32).at[:3].set(params["out_b"])

    prepped = {
        "word_emb": params["word_emb"],
        "pos_emb": params["pos_emb"],
        "type_emb": params["type_emb"],
        "emb_ln_g": params["emb_ln_g"], "emb_ln_b": params["emb_ln_b"],
        "pooler_w": bf16(params["pooler_w"]), "pooler_b": params["pooler_b"],
        "fc1_w": bf16(params["fc1_w"]), "fc1_b": params["fc1_b"],
        "out_w": bf16(out_w_p), "out_b": out_b_p,
        "layers": [],
    }
    for lyr in params["layers"]:
        prepped["layers"].append({
            # 1/sqrt(Dh) folded into Q columns of the fused QKV projection.
            "qkv_w": bf16(jnp.concatenate(
                [lyr["q_w"] * q_scale, lyr["k_w"], lyr["v_w"]], axis=1)),
            "qkv_b": jnp.concatenate(
                [lyr["q_b"] * q_scale, lyr["k_b"], lyr["v_b"]], axis=0),
            "o_w": bf16(lyr["o_w"]), "o_b": lyr["o_b"],
            "attn_ln_g": lyr["attn_ln_g"], "attn_ln_b": lyr["attn_ln_b"],
            "ffn_w1": bf16(lyr["ffn_w1"]), "ffn_b1": lyr["ffn_b1"],
            "ffn_w2": bf16(lyr["ffn_w2"]), "ffn_b2": lyr["ffn_b2"],
            "ffn_ln_g": lyr["ffn_ln_g"], "ffn_ln_b": lyr["ffn_ln_b"],
        })
    return prepped


def bert_classifier_forward(params, input_ids, attention_mask, cfg):
    B, S = input_ids.shape
    H, NH = cfg["hidden"], cfg["heads"]

    # Embeddings (gather is glue; LayerNorm is a Pallas kernel emitting bf16).
    # TODO(synk): token_type_ids hard-coded to type 0 for all positions.
    x = (params["word_emb"][input_ids]
         + params["pos_emb"][jnp.arange(S)][None, :, :]
         + params["type_emb"][0][None, None, :])                   # (B, S, H) f32
    x = pallas_layernorm(x.reshape(B * S, H),
                         params["emb_ln_g"], params["emb_ln_b"])   # (B*S, H) bf16

    mask3 = attention_mask.astype(jnp.float32).reshape(B, 1, S)

    for lyr in params["layers"]:
        # Fused QKV projection (scale pre-folded into Q weights).
        qkv = pallas_dense(x, lyr["qkv_w"], lyr["qkv_b"])          # (B*S, 3H) bf16
        # Attention + output projection + residual + LayerNorm, all in one kernel.
        x = pallas_attention_block(qkv.reshape(B, S, 3 * H), mask3,
                                   x.reshape(B, S, H),
                                   lyr["o_w"], lyr["o_b"],
                                   lyr["attn_ln_g"], lyr["attn_ln_b"],
                                   NH).reshape(B * S, H)           # (B*S, H) bf16
        # FFN: dense+GELU, then dense fused with bias + residual + LayerNorm.
        h1 = pallas_dense(x, lyr["ffn_w1"], lyr["ffn_b1"], act="gelu")
        x = pallas_dense_add_ln(h1, lyr["ffn_w2"], lyr["ffn_b2"], x,
                                lyr["ffn_ln_g"], lyr["ffn_ln_b"])

    # Pooler: tanh(W_p @ [CLS] + b_p) -> pooled_output (bf16, MXU path end-to-end)
    cls = x.reshape(B, S, H)[:, 0, :]
    pooled = pallas_dense(cls, params["pooler_w"], params["pooler_b"],
                          act="tanh", out_dtype=jnp.bfloat16)

    # BERT_architecture head: fc1 -> dropout -> out  (fused, lane-padded to 128)
    logits = pallas_head(pooled, params["fc1_w"], params["fc1_b"],
                         params["out_w"], params["out_b"])
    return logits[:, :3]


if __name__ == "__main__":
    cfg = dict(vocab=100, max_pos=16, type_vocab=2,
               hidden=32, heads=4, layers=2, intermediate=64)
    key = jax.random.PRNGKey(0)
    pkey, ikey = jax.random.split(key)
    params = prepare_params(init_params(pkey, cfg), cfg["heads"])

    B, S = 2, 8
    input_ids = jax.random.randint(ikey, (B, S), 0, cfg["vocab"], dtype=jnp.int32)
    attention_mask = jnp.array([[1, 1, 1, 1, 1, 1, 0, 0],
                                [1, 1, 1, 1, 1, 1, 1, 1]], dtype=jnp.int32)

    logits = bert_classifier_forward(params, input_ids, attention_mask, cfg)
    logits = jax.block_until_ready(logits)
    assert logits.shape == (B, 3) and logits.dtype == jnp.float32
    assert bool(jnp.all(jnp.isfinite(logits)))
    print("KERNEL_OK")
</pallas_src>

<mosaic_0001>
module attributes {stable_mosaic.version = 11 : i64} {
  func.func @_ln_kernel(%arg0: i32, %arg1: memref<16x32xf32, #tpu.memory_space<vmem>>, %arg2: memref<1x32xf32, #tpu.memory_space<vmem>>, %arg3: memref<1x32xf32, #tpu.memory_space<vmem>>, %arg4: memref<16x32xbf16, #tpu.memory_space<vmem>>) attributes {dimension_semantics = [#tpu.dimension_semantics<parallel>], iteration_bounds = array<i64: 1>, scalar_prefetch = 0 : i64, scratch_operands = 0 : i64, tpu.core_type = #tpu.core_type<tc>, window_params = [{transform_indices = @transform_0, window_bounds = array<i64: 16, 32>}, {pipeline_mode = #tpu.pipeline_mode<synchronous>, transform_indices = @transform_1, window_bounds = array<i64: 1, 32>}, {pipeline_mode = #tpu.pipeline_mode<synchronous>, transform_indices = @transform_2, window_bounds = array<i64: 1, 32>}, {transform_indices = @transform_3, window_bounds = array<i64: 16, 32>}]} {
    %c0 = arith.constant 0 : index
    %c0_0 = arith.constant 0 : index
    %0 = vector.load %arg1[%c0, %c0_0] : memref<16x32xf32, #tpu.memory_space<vmem>>, vector<16x32xf32>
    %c0_1 = arith.constant 0 : index
    %c0_2 = arith.constant 0 : index
    %1 = vector.load %arg2[%c0_1, %c0_2] : memref<1x32xf32, #tpu.memory_space<vmem>>, vector<1x32xf32>
    %c0_3 = arith.constant 0 : index
    %c0_4 = arith.constant 0 : index
    %2 = vector.load %arg3[%c0_3, %c0_4] : memref<1x32xf32, #tpu.memory_space<vmem>>, vector<1x32xf32>
    %cst = arith.constant dense<0.000000e+00> : vector<16xf32>
    %3 = vector.multi_reduction <add>, %0, %cst [1] : vector<16x32xf32> to vector<16xf32>
    %4 = vector.shape_cast %3 : vector<16xf32> to vector<16x1xf32>
    %cst_5 = arith.constant 3.200000e+01 : f32
    %5 = vector.broadcast %cst_5 : f32 to vector<16x1xf32>
    %6 = arith.divf %4, %5 : vector<16x1xf32>
    %7 = vector.broadcast %6 : vector<16x1xf32> to vector<16x32xf32>
    %8 = arith.subf %0, %7 : vector<16x32xf32>
    %9 = arith.mulf %8, %8 : vector<16x32xf32>
    %cst_6 = arith.constant dense<0.000000e+00> : vector<16xf32>
    %10 = vector.multi_reduction <add>, %9, %cst_6 [1] : vector<16x32xf32> to vector<16xf32>
    %11 = vector.shape_cast %10 : vector<16xf32> to vector<16x1xf32>
    %cst_7 = arith.constant 3.200000e+01 : f32
    %12 = vector.broadcast %cst_7 : f32 to vector<16x1xf32>
    %13 = arith.divf %11, %12 : vector<16x1xf32>
    %14 = vector.broadcast %6 : vector<16x1xf32> to vector<16x32xf32>
    %15 = arith.subf %0, %14 : vector<16x32xf32>
    %cst_8 = arith.constant 9.99999996E-13 : f32
    %16 = vector.broadcast %cst_8 : f32 to vector<16x1xf32>
    %17 = arith.addf %13, %16 : vector<16x1xf32>
    %18 = math.rsqrt %17 : vector<16x1xf32>
    %19 = vector.broadcast %18 : vector<16x1xf32> to vector<16x32xf32>
    %20 = arith.mulf %15, %19 : vector<16x32xf32>
    %21 = vector.broadcast %1 : vector<1x32xf32> to vector<16x32xf32>
    %22 = arith.mulf %20, %21 : vector<16x32xf32>
    %23 = vector.broadcast %2 : vector<1x32xf32> to vector<16x32xf32>
    %24 = arith.addf %22, %23 : vector<16x32xf32>
    %25 = arith.truncf %24 : vector<16x32xf32> to vector<16x32xbf16>
    %c0_9 = arith.constant 0 : index
    %c0_10 = arith.constant 0 : index
    %26 = vector.load %arg4[%c0_9, %c0_10] : memref<16x32xbf16, #tpu.memory_space<vmem>>, vector<16x32xbf16>
    tpu.vector_store %arg4[%c0_9, %c0_10], %25 {strides = array<i32>} : memref<16x32xbf16, #tpu.memory_space<vmem>>, vector<16x32xbf16>,
    return
  }
  func.func @transform_0(%arg0: i32) -> (i32, i32) {
    %c0_i32 = arith.constant 0 : i32
    %c0_i32_0 = arith.constant 0 : i32
    return %arg0, %c0_i32 : i32, i32
  }
  func.func @transform_1(%arg0: i32) -> (i32, i32) {
    %c0_i32 = arith.constant 0 : i32
    %c0_i32_0 = arith.constant 0 : i32
    %c0_i32_1 = arith.constant 0 : i32
    return %c0_i32, %c0_i32_0 : i32, i32
  }
  func.func @transform_2(%arg0: i32) -> (i32, i32) {
    %c0_i32 = arith.constant 0 : i32
    %c0_i32_0 = arith.constant 0 : i32
    %c0_i32_1 = arith.constant 0 : i32
    return %c0_i32, %c0_i32_0 : i32, i32
  }
  func.func @transform_3(%arg0: i32) -> (i32, i32) {
    %c0_i32 = arith.constant 0 : i32
    %c0_i32_0 = arith.constant 0 : i32
    return %arg0, %c0_i32 : i32, i32
  }
}

</mosaic_0001>

<llo_original>
// kernel: tpu_custom_call.1
$region0: #{tpu_custom_call.1}
  #allocation0 [shape = 'u32[]', space=smem, size = 0x4, offset = 0x4, fixed_abs, tag = 'smem constant byte address 0x4 - core index']
  #allocation1 [shape = 'u32[144,128]{1,0:T(1,128)}', space=vmem, size = 0x12000, scoped, tag = 'internal scratch']
  %s0 = inlined_call_operand.hbm [shape: f32[16,32], index: 0, kind: input, shape index: {}]
  %s1 = inlined_call_operand.vmem [shape: f32[1,32], index: 1, kind: input, shape index: {}]
  %s2 = inlined_call_operand.vmem [shape: f32[1,32], index: 2, kind: input, shape index: {}]
  %s3 = inlined_call_operand.hbm [shape: bf16[16,32], index: 3, kind: output, shape index: {}]
  %s4 = sld [smem:[#allocation0]]
  $region26: #{tpu_custom_call.1} parent=0
    _
  %s6 = ssub.s32 1, %s4
  %s7 = scalar_select 0, %s6, %s4
  $region1: #{tpu_custom_call.1} parent=0
    #allocation2 [shape = 'u8[8192]{0}', space=vmem, size = 0x2000, scoped, tag = 'input window, operand 0, single buffered']
    #allocation3 [shape = 's32[1]{0}', space=sflag, size = 0x4, scoped, tag = 'scoped memory for tpu_custom_call.1']
    #allocation4 [shape = 's32[1]{0}', space=sflag, size = 0x4, scoped, tag = 'scoped memory for tpu_custom_call.1']
    #allocation5 [shape = 'u8[4096]{0}', space=vmem, size = 0x1000, scoped, tag = 'output window, operand 0, single buffered']
    %8 = vsyncpa [#allocation3], 0
    %9 = vsyncpa [#allocation4], 0
    // Predicated region
    $region2: #{tpu_custom_call.1} parent=1 // pred_check
      _
    $region3: #{tpu_custom_call.1} parent=1 // pred_check_branch
      %11 = sbr.rel (0) target = $region5
    $region4: #{tpu_custom_call.1} parent=1 // pred_region
      %s13 = ssub.s32 256, 256
      %14 = vsyncadd [#allocation3], %s13
      %s15 = sshll.u32 [#allocation2], 4
      %s16 = int_to_ptr.vmem [resolvable:$true] %s15
      %21 = dma.hbm_to_vmem [thread:$0]  %s0, 256, %s16, [#allocation3], 128, 128, 8
    $region5: #{tpu_custom_call.1} parent=1 // pred_fallthru
      _
    // Predicated region
    $region6: #{tpu_custom_call.1} parent=1 // pred_check
      _
    $region7: #{tpu_custom_call.1} parent=1 // pred_check_branch
      %23 = sbr.rel (0) target = $region9
    $region8: #{tpu_custom_call.1} parent=1 // pred_region
      _
    $region9: #{tpu_custom_call.1} parent=1 // pred_fallthru
      _
    // Predicated region
    $region10: #{tpu_custom_call.1} parent=1 // pred_check
      _
    $region11: #{tpu_custom_call.1} parent=1 // pred_check_branch
      %25 = sbr.rel (0) target = $region13
    $region12: #{tpu_custom_call.1} parent=1 // pred_region
      _
    $region13: #{tpu_custom_call.1} parent=1 // pred_fallthru
      _
    // Predicated region
    $region14: #{tpu_custom_call.1} parent=1 // pred_check
      _
    $region15: #{tpu_custom_call.1} parent=1 // pred_check_branch
      %27 = sbr.rel (0) target = $region17
    $region16: #{tpu_custom_call.1} parent=1 // pred_region
      %28 = dma.done [#allocation3], 256
    $region17: #{tpu_custom_call.1} parent=1 // pred_fallthru
      _
    %v29 = vld [vmem:[#allocation2] sm:$0xff]
    %v30 = vld [vmem:[#allocation2 + $0x8] sm:$0xff]
    %v31 = vld [vmem:[%s1] sm:$0x1]
    %v32 = vld [vmem:[%s2] sm:$0x1]
    %vm33 = vcmask 261120
    %v34 = vsel %vm33, %v29, 0.0
    %35 = vadd.xlane.f32.xlu0 %v34
    %v36 = vpop.xlane.xlu0 %35
    %v37 = vsel %vm33, %v30, 0.0
    %38 = vadd.xlane.f32.xlu0 %v37
    %v39 = vpop.xlane.xlu0 %38
    %v40 = vrcp.pop 32.0
    %v41 = vmul.f32 %v36, %v40
    %v42 = vmul.f32 %v39, %v40
    %v43 = vsub.f32 %v29, %v41
    %v44 = vsub.f32 %v30, %v42
    %v45 = vmul.f32 %v43, %v43
    %v46 = vmul.f32 %v44, %v44
    %v47 = vsel %vm33, %v45, 0.0
    %48 = vadd.xlane.f32.xlu0 %v47
    %v49 = vpop.xlane.xlu0 %48
    %v50 = vsel %vm33, %v46, 0.0
    %51 = vadd.xlane.f32.xlu0 %v50
    %v52 = vpop.xlane.xlu0 %51
    %v53 = vmul.f32 %v49, %v40
    %v54 = vmul.f32 %v52, %v40
    %v55 = vadd.f32 %v53, 1e-12
    %v56 = vadd.f32 %v54, 1e-12
    %v57 = vrsqrt.pop %v55
    %v58 = vrsqrt.pop %v56
    %v59 = vmul.f32 %v43, %v57
    %v60 = vmul.f32 %v44, %v58
    %v62 = vlaneseq
    %v63 = vshrl.u32 %v62, 7
    %v64 = vsub.s32 0, %v63
    %v65 = vrot.slane %v31, %v64
    %v67 = vmul.f32 %v59, %v65
    %v68 = vmul.f32 %v60, %v65
    %v70 = vlaneseq
    %v71 = vshrl.u32 %v70, 7
    %v72 = vsub.s32 0, %v71
    %v73 = vrot.slane %v32, %v72
    %v75 = vadd.f32 %v67, %v73
    %v76 = vadd.f32 %v68, %v73
    %v77 = vpack.c.bf16 %v76, %v75
    %v79 = vunpack.c.l.b16 %v77
    %v80 = vunpack.c.h.b16 %v77
    %v81 = vpack.c.b16 %v79, %v79
    %v82 = vpack.c.b16 %v80, %v80
    %vm85 = vcmask 257024
    %86 = vst.msk [vmem:[#allocation5] sm:$0xf] %vm85, %v81
    %87 = vst.msk [vmem:[#allocation5 + $0x4] sm:$0xf] %vm85, %v82
    // Predicated region
    $region18: #{tpu_custom_call.1} parent=1 // pred_check
      _
    $region19: #{tpu_custom_call.1} parent=1 // pred_check_branch
      %89 = sbr.rel (0) target = $region21
    $region20: #{tpu_custom_call.1} parent=1 // pred_region
      %s91 = ssub.s32 128, 128
      %92 = vsyncadd [#allocation4], %s91
      %s93 = sshll.u32 [#allocation5], 4
      %s94 = int_to_ptr.vmem [resolvable:$true] %s93
      %99 = dma.vmem_to_hbm [thread:$0]  %s94, 128, %s3, [#allocation4], 64, 64, 4
    $region21: #{tpu_custom_call.1} parent=1 // pred_fallthru
      _
    // Predicated region
    $region22: #{tpu_custom_call.1} parent=1 // pred_check
      _
    $region23: #{tpu_custom_call.1} parent=1 // pred_check_branch
      %101 = sbr.rel (0) target = $region25
    $region24: #{tpu_custom_call.1} parent=1 // pred_region
      %102 = dma.done [#allocation4], 128
    $region25: #{tpu_custom_call.1} parent=1 // pred_fallthru
      _
    %103 = vsyncpa [#allocation3], 1
    %104 = vsyncpa [#allocation4], 1

</llo_original>
